<compile_context>
chip_gen: v5e
topology: v5e:2x2
jax: 0.10.0
libtpu: 0.0.40
codegen_flags: <defaults>
</compile_context>

<pallas_src>
import jax
import jax.numpy as jnp
from jax import lax
from jax.experimental import pallas as pl
from jax.experimental.pallas import tpu as pltpu

IN_FEATURES = 5
OUT_FEATURES = 5

# Below this batch size XLA's fused linear beats a standalone pallas_call.
_PALLAS_MIN_BATCH = 32768


def _round_up(x, m):
    return ((x + m - 1) // m) * m


def _linear_kernel(x_ref, w_ref, b_ref, o_ref):
    # x_ref: (TILE, in)  -- native row-major activations, batch on sublanes
    # w_ref: (out, in)   -- PyTorch convention, used directly (no transpose)
    # b_ref: (1, out)
    # o_ref: (TILE, out)
    y = lax.dot_general(
        x_ref[...], w_ref[...],
        dimension_numbers=(((1,), (1,)), ((), ())),   # contract in_features
        preferred_element_type=jnp.float32)
    o_ref[...] = (y + b_ref[...]).astype(o_ref.dtype)


def card2code_forward(inputs, weight, bias, *, tile_rows=16384, use_pallas=None):
    """Pallas implementation of nn.Linear(5, 5) forward.

    inputs: (B, 5)  float32 (or bf16)
    weight: (5, 5)  (out_features, in_features) -- PyTorch convention
    bias:   (5,)
    returns (B, 5) in the input dtype
    """
    B = inputs.shape[0]

    if use_pallas is None:
        use_pallas = B >= _PALLAS_MIN_BATCH
    if not use_pallas:
        # XLA fused path: single read + single write, no kernel launch.
        return (inputs @ weight.T + bias).astype(inputs.dtype)

    # Batch tile on the sublane axis: multiple of 8, capped at the batch size.
    tile = max(8, _round_up(min(tile_rows, B), 8))
    grid = (pl.cdiv(B, tile),)   # ragged last block handled by Pallas

    bias2d = bias.reshape(1, OUT_FEATURES)

    # VMEM footprint: each (tile, 5) block pads lanes 5 -> 128, i.e.
    # 128 * itemsize bytes per row; in + out, each double-buffered.
    lane_bytes = 128 * jnp.dtype(inputs.dtype).itemsize
    vmem_limit = int(4 * tile * lane_bytes + (8 << 20))   # + headroom for W/bias/scratch

    return pl.pallas_call(
        _linear_kernel,
        out_shape=jax.ShapeDtypeStruct((B, OUT_FEATURES), inputs.dtype),
        grid=grid,
        in_specs=[
            # activations: tiled along the batch (sublane) axis, native layout
            pl.BlockSpec((tile, IN_FEATURES), lambda i: (i, 0)),
            # weight: grid-invariant, stays resident in VMEM
            pl.BlockSpec((OUT_FEATURES, IN_FEATURES), lambda i: (0, 0)),
            # bias: grid-invariant, stays resident in VMEM
            pl.BlockSpec((1, OUT_FEATURES), lambda i: (0, 0)),
        ],
        out_specs=pl.BlockSpec((tile, OUT_FEATURES), lambda i: (i, 0)),
        compiler_params=pltpu.CompilerParams(
            dimension_semantics=("parallel",),
            vmem_limit_bytes=vmem_limit,
        ),
    )(inputs, weight, bias2d)


if __name__ == "__main__":
    key = jax.random.PRNGKey(0)
    k_x, k_w, k_b = jax.random.split(key, 3)

    # Small batch, deliberately NOT a multiple of the tile, to exercise the
    # ragged-last-block path and a multi-step grid (tile_rows=128 -> grid of 3).
    B = 260
    x = jax.random.normal(k_x, (B, IN_FEATURES), dtype=jnp.float32)

    # Params mimicking nn.Linear's uniform(-1/sqrt(in), 1/sqrt(in)) init.
    bound = 1.0 / (IN_FEATURES ** 0.5)
    W = jax.random.uniform(
        k_w, (OUT_FEATURES, IN_FEATURES), minval=-bound, maxval=bound,
        dtype=jnp.float32)
    b = jax.random.uniform(
        k_b, (OUT_FEATURES,), minval=-bound, maxval=bound, dtype=jnp.float32)

    # Force the Pallas path at this small test size (prod default gates to XLA
    # below _PALLAS_MIN_BATCH rows).
    y = card2code_forward(x, W, b, tile_rows=128, use_pallas=True)
    y = jax.block_until_ready(y)

    # Reference check against plain JAX (same math as PyTorch's nn.Linear).
    y_ref = x @ W.T + b
    assert y.shape == (B, OUT_FEATURES)
    assert jnp.allclose(y, y_ref, atol=1e-5, rtol=1e-5), "mismatch vs reference"

    print("KERNEL_OK")
</pallas_src>

<mosaic_0001>
module attributes {stable_mosaic.version = 11 : i64} {
  func.func @_linear_kernel(%arg0: i32, %arg1: memref<128x5xf32, #tpu.memory_space<vmem>>, %arg2: memref<5x5xf32, #tpu.memory_space<vmem>>, %arg3: memref<1x5xf32, #tpu.memory_space<vmem>>, %arg4: memref<128x5xf32, #tpu.memory_space<vmem>>) attributes {dimension_semantics = [#tpu.dimension_semantics<parallel>], iteration_bounds = array<i64: 3>, scalar_prefetch = 0 : i64, scratch_operands = 0 : i64, tpu.core_type = #tpu.core_type<tc>, window_params = [{transform_indices = @transform_0, window_bounds = array<i64: 128, 5>}, {pipeline_mode = #tpu.pipeline_mode<synchronous>, transform_indices = @transform_1, window_bounds = array<i64: 5, 5>}, {pipeline_mode = #tpu.pipeline_mode<synchronous>, transform_indices = @transform_2, window_bounds = array<i64: 1, 5>}, {transform_indices = @transform_3, window_bounds = array<i64: 128, 5>}]} {
    %c0 = arith.constant 0 : index
    %c0_0 = arith.constant 0 : index
    %0 = vector.load %arg1[%c0, %c0_0] : memref<128x5xf32, #tpu.memory_space<vmem>>, vector<128x5xf32>
    %c0_1 = arith.constant 0 : index
    %c0_2 = arith.constant 0 : index
    %1 = vector.load %arg2[%c0_1, %c0_2] : memref<5x5xf32, #tpu.memory_space<vmem>>, vector<5x5xf32>
    %cst = arith.constant dense<0.000000e+00> : vector<128x5xf32>
    %2 = tpu.matmul %0, %1, %cst {dimension_numbers = #tpu.dot_dimension_numbers<[1], [1], [0], [0], [0, 0, 1, 0], [], []>} : vector<128x5xf32>, vector<5x5xf32>, vector<128x5xf32> -> vector<128x5xf32>
    %c0_3 = arith.constant 0 : index
    %c0_4 = arith.constant 0 : index
    %3 = vector.load %arg3[%c0_3, %c0_4] : memref<1x5xf32, #tpu.memory_space<vmem>>, vector<1x5xf32>
    %4 = vector.broadcast %3 : vector<1x5xf32> to vector<128x5xf32>
    %5 = arith.addf %2, %4 : vector<128x5xf32>
    %c0_5 = arith.constant 0 : index
    %c0_6 = arith.constant 0 : index
    %6 = vector.load %arg4[%c0_5, %c0_6] : memref<128x5xf32, #tpu.memory_space<vmem>>, vector<128x5xf32>
    tpu.vector_store %arg4[%c0_5, %c0_6], %5 {strides = array<i32>} : memref<128x5xf32, #tpu.memory_space<vmem>>, vector<128x5xf32>,
    return
  }
  func.func @transform_0(%arg0: i32) -> (i32, i32) {
    %c0_i32 = arith.constant 0 : i32
    %c0_i32_0 = arith.constant 0 : i32
    return %arg0, %c0_i32 : i32, i32
  }
  func.func @transform_1(%arg0: i32) -> (i32, i32) {
    %c0_i32 = arith.constant 0 : i32
    %c0_i32_0 = arith.constant 0 : i32
    %c0_i32_1 = arith.constant 0 : i32
    return %c0_i32, %c0_i32_0 : i32, i32
  }
  func.func @transform_2(%arg0: i32) -> (i32, i32) {
    %c0_i32 = arith.constant 0 : i32
    %c0_i32_0 = arith.constant 0 : i32
    %c0_i32_1 = arith.constant 0 : i32
    return %c0_i32, %c0_i32_0 : i32, i32
  }
  func.func @transform_3(%arg0: i32) -> (i32, i32) {
    %c0_i32 = arith.constant 0 : i32
    %c0_i32_0 = arith.constant 0 : i32
    return %arg0, %c0_i32 : i32, i32
  }
}

</mosaic_0001>

<llo_original>
// kernel: tpu_custom_call.1
$region0: #{tpu_custom_call.1}
  #allocation0 [shape = 'u32[]', space=smem, size = 0x4, offset = 0x4, fixed_abs, tag = 'smem constant byte address 0x4 - core index']
  #allocation1 [shape = 'u32[72,128]{1,0:T(1,128)}', space=vmem, size = 0x9000, scoped, tag = 'internal scratch']
  %s0 = inlined_call_operand.vmem [shape: f32[260,5], index: 0, kind: input, shape index: {}]
  %s1 = inlined_call_operand.vmem [shape: f32[5,5], index: 1, kind: input, shape index: {}]
  %s2 = inlined_call_operand.vmem [shape: f32[1,5], index: 2, kind: input, shape index: {}]
  %s3 = inlined_call_operand.vmem [shape: f32[260,5], index: 3, kind: output, shape index: {}]
  %s4 = sld [smem:[#allocation0]]
  $region93: #{tpu_custom_call.1} parent=0
    _
  %s6 = ssub.s32 1, %s4
  %s7 = scalar_select 0, %s6, %s4
  $region1: #{tpu_custom_call.1} parent=0
    #allocation2 [shape = 'u8[131072]{0}', space=vmem, size = 0x20000, scoped, tag = 'output window, operand 0']
    loop: start=0, step=1, limit=5
    $region2: #{tpu_custom_call.1} parent=1 // loop_pre_header
      _
    $region3: #{tpu_custom_call.1} parent=1 // loop_header
      %s9 = sphi 0, %s13
      %p10 = scmp.ge.s32.totalorder %s9, 5
      %s19 = sphi 0, %s21
      %s22 = sphi 0, %s19
      %s23 = sphi 0, %s22
      %s39 = sphi 0, %s23
      %s43 = sphi 0, %s43
      %s45 = sphi 0, %s43
      %s46 = sphi 0, %s45
      %s60 = sphi 0, %s46
      %s64 = sphi 0, %s64
      %s66 = sphi 0, %s64
      %s67 = sphi 0, %s66
      %s81 = sphi 0, %s67
      %s87 = sphi 0, %s89
      %s90 = sphi 0, %s87
      %s91 = sphi 0, %s90
      %s107 = sphi 0, %s91
    $region4: #{tpu_custom_call.1} parent=1 // loop_header_branch
      %12 = sbr.rel (%p10) target = $region8
    $region5: #{tpu_custom_call.1} parent=1 // loop_body
      %s14 = ssub.s32 %s9, 1
      %s15 = ssub.s32 %s9, 2
      %s16 = sadd.s32 %s9, 1
      %s17 = ssub.s32 %s9, %s16
      %p18 = scmp.eq.s32.totalorder %s17, 0
      %s20 = sadd.s32 %s19, 1
      %s21 = scalar_select %p18, %s19, %s20
      %p24 = pneg %p18
      %p25 = scmp.eq.s32.totalorder %s9, 2
      %p26 = por %p24, %p25
      %p27 = scmp.ne.s32.totalorder %s19, %s22
      %p28 = scmp.eq.s32.totalorder %s9, 0
      %p29 = por %p27, %p28
      %p30 = scmp.ne.s32.totalorder %s19, %s22
      %p31 = scmp.eq.s32.totalorder %s14, 2
      %p32 = por %p30, %p31
      %p33 = scmp.ne.s32.totalorder %s22, %s23
      %p34 = scmp.eq.s32.totalorder %s14, 0
      %p35 = por %p33, %p34
      %p36 = scmp.ne.s32.totalorder %s22, %s23
      %p37 = scmp.eq.s32.totalorder %s15, 2
      %p38 = por %p36, %p37
      %p40 = scmp.ne.s32.totalorder %s23, %s39
      %p41 = scmp.eq.s32.totalorder %s15, 0
      %p42 = por %p40, %p41
      %s44 = sadd.s32 %s43, 1
      %p47 = scmp.eq.s32.totalorder %s9, 2
      %p48 = scmp.ne.s32.totalorder %s43, %s45
      %p49 = scmp.eq.s32.totalorder %s9, 0
      %p50 = por %p48, %p49
      %p51 = scmp.ne.s32.totalorder %s43, %s45
      %p52 = scmp.eq.s32.totalorder %s14, 2
      %p53 = por %p51, %p52
      %p54 = scmp.ne.s32.totalorder %s45, %s46
      %p55 = scmp.eq.s32.totalorder %s14, 0
      %p56 = por %p54, %p55
      %p57 = scmp.ne.s32.totalorder %s45, %s46
      %p58 = scmp.eq.s32.totalorder %s15, 2
      %p59 = por %p57, %p58
      %p61 = scmp.ne.s32.totalorder %s46, %s60
      %p62 = scmp.eq.s32.totalorder %s15, 0
      %p63 = por %p61, %p62
      %s65 = sadd.s32 %s64, 1
      %p68 = scmp.eq.s32.totalorder %s9, 2
      %p69 = scmp.ne.s32.totalorder %s64, %s66
      %p70 = scmp.eq.s32.totalorder %s9, 0
      %p71 = por %p69, %p70
      %p72 = scmp.ne.s32.totalorder %s64, %s66
      %p73 = scmp.eq.s32.totalorder %s14, 2
      %p74 = por %p72, %p73
      %p75 = scmp.ne.s32.totalorder %s66, %s67
      %p76 = scmp.eq.s32.totalorder %s14, 0
      %p77 = por %p75, %p76
      %p78 = scmp.ne.s32.totalorder %s66, %s67
      %p79 = scmp.eq.s32.totalorder %s15, 2
      %p80 = por %p78, %p79
      %p82 = scmp.ne.s32.totalorder %s67, %s81
      %p83 = scmp.eq.s32.totalorder %s15, 0
      %p84 = por %p82, %p83
      %s85 = ssub.s32 %s9, %s16
      %p86 = scmp.eq.s32.totalorder %s85, 0
      %s88 = sadd.s32 %s87, 1
      %s89 = scalar_select %p86, %s87, %s88
      %p92 = pneg %p86
      %p93 = scmp.eq.s32.totalorder %s9, 2
      %p94 = por %p92, %p93
      %p95 = scmp.ne.s32.totalorder %s87, %s90
      %p96 = scmp.eq.s32.totalorder %s9, 0
      %p97 = por %p95, %p96
      %p98 = scmp.ne.s32.totalorder %s87, %s90
      %p99 = scmp.eq.s32.totalorder %s14, 2
      %p100 = por %p98, %p99
      %p101 = scmp.ne.s32.totalorder %s90, %s91
      %p102 = scmp.eq.s32.totalorder %s14, 0
      %p103 = por %p101, %p102
      %p104 = scmp.ne.s32.totalorder %s90, %s91
      %p105 = scmp.eq.s32.totalorder %s15, 2
      %p106 = por %p104, %p105
      %p108 = scmp.ne.s32.totalorder %s91, %s107
      %p109 = scmp.eq.s32.totalorder %s15, 0
      %p110 = por %p108, %p109
      %p111 = scmp.le.s32.totalorder 1, %s9
      %p112 = scmp.lt.s32.totalorder %s9, 4
      %p113 = pnand %p111, %p112
      %p114 = pneg %p113
      // Predicated region
      $region9: #{tpu_custom_call.1} parent=5 // pred_check
        _
      $region10: #{tpu_custom_call.1} parent=5 // pred_check_branch
        %116 = sbr.rel (%p113) target = $region12
      $region11: #{tpu_custom_call.1} parent=5 // pred_region
        %s117 = ssub.s32 %s9, 1
        // Predicated region
        $region13: #{tpu_custom_call.1} parent=11 // pred_check
          %p118 = pneg %p56
        $region14: #{tpu_custom_call.1} parent=11 // pred_check_branch
          %120 = sbr.rel (%p118) target = $region16
        $region15: #{tpu_custom_call.1} parent=11 // pred_region
          _
        $region16: #{tpu_custom_call.1} parent=11 // pred_fallthru
          _
        // Predicated region
        $region17: #{tpu_custom_call.1} parent=11 // pred_check
          %p121 = pneg %p77
        $region18: #{tpu_custom_call.1} parent=11 // pred_check_branch
          %123 = sbr.rel (%p121) target = $region20
        $region19: #{tpu_custom_call.1} parent=11 // pred_region
          _
        $region20: #{tpu_custom_call.1} parent=11 // pred_fallthru
          _
      $region12: #{tpu_custom_call.1} parent=5 // pred_fallthru
        _
      %p124 = scmp.lt.s32.totalorder %s9, 3
      // Predicated region
      $region21: #{tpu_custom_call.1} parent=5 // pred_check
        %p125 = pneg %p124
      $region22: #{tpu_custom_call.1} parent=5 // pred_check_branch
        %127 = sbr.rel (%p125) target = $region24
      $region23: #{tpu_custom_call.1} parent=5 // pred_region
        // Predicated region
        $region25: #{tpu_custom_call.1} parent=23 // pred_check
          %p128 = pneg %p29
        $region26: #{tpu_custom_call.1} parent=23 // pred_check_branch
          %130 = sbr.rel (%p128) target = $region28
        $region27: #{tpu_custom_call.1} parent=23 // pred_region
          %s131 = smul.u32 16, %s9
          %s132 = ssub.s32 33, %s131
          %p133 = scmp.lt.s32.totalorder %s132, 16
          %s134 = scalar_select %p133, %s132, 16
          %s135 = smul.u32 8, %s134
          %p136 = scmp.lt.s32.totalorder %s131, 32
          %s137 = scalar_select %p136, %s131, 32
          %s138 = smul.addr %s137, 8
          %s139 = scalar_lea.vmem %s0, %s138
          %s140 = smul.u32 16, %s9
          %s141 = ssub.s32 33, %s140
          %p142 = scmp.lt.s32.totalorder %s141, 16
          %s143 = scalar_select %p142, %s141, 16
          %s144 = smul.u32 8, %s143
        $region28: #{tpu_custom_call.1} parent=23 // pred_fallthru
          _
      $region24: #{tpu_custom_call.1} parent=5 // pred_fallthru
        _
      %p145 = scmp.le.s32.totalorder 1, %s9
      %p146 = scmp.lt.s32.totalorder %s9, 4
      %p147 = pnand %p145, %p146
      %p148 = pneg %p147
      // Predicated region
      $region29: #{tpu_custom_call.1} parent=5 // pred_check
        _
      $region30: #{tpu_custom_call.1} parent=5 // pred_check_branch
        %150 = sbr.rel (%p147) target = $region32
      $region31: #{tpu_custom_call.1} parent=5 // pred_region
        %s151 = ssub.s32 %s9, 1
        %s152 = smul.u32 16, %s14
        %s153 = ssub.s32 33, %s152
        %p154 = scmp.lt.s32.totalorder %s153, 16
        %s155 = scalar_select %p154, %s153, 16
        %s156 = smul.u32 8, %s155
        %p157 = scmp.lt.s32.totalorder %s152, 32
        %s158 = scalar_select %p157, %s152, 32
        %s159 = smul.addr %s158, 8
        %s160 = scalar_lea.vmem %s0, %s159
        %p161 = pneg %p35
        %p162 = pneg %p32
        %p163 = pneg %p56
        %p164 = pneg %p53
        %p165 = pneg %p77
        %p166 = pneg %p74
        %p167 = pneg %p103
        %p168 = pneg %p100
        %s169 = sand.u32 %s90, 1
        %s170 = sand.u32 %s90, 1
        %s171 = smul.addr %s170, 128
        %s172 = scalar_lea.vmem [#allocation2], %s171
        %s173 = smul.u32 16, %s14
        %s174 = ssub.s32 33, %s173
        %p175 = scmp.lt.s32.totalorder %s174, 16
        %s176 = scalar_select %p175, %s174, 16
        %s177 = smul.u32 8, %s176
        %p178 = scmp.lt.s32.totalorder %s173, 32
        %s179 = scalar_select %p178, %s173, 32
        %s180 = smul.addr %s179, 8
        %s181 = scalar_lea.vmem %s0, %s180
        %s182 = smul.u32 16, %s14
        %s183 = ssub.s32 33, %s182
        %p184 = scmp.lt.s32.totalorder %s183, 16
        %s185 = scalar_select %p184, %s183, 16
        %s186 = smul.u32 8, %s185
        %s187 = smul.u32 16, %s14
        %s188 = ssub.s32 33, %s187
        %p189 = scmp.lt.s32.totalorder %s188, 16
        %s190 = scalar_select %p189, %s188, 16
        %s191 = smul.u32 8, %s190
        %v192 = vld [vmem:[%s181] sm:$0xff]
        %v193 = vld [vmem:[%s181 + $0x8] sm:$0xff]
        %v194 = vld [vmem:[%s181 + $0x10] sm:$0xff]
        %v195 = vld [vmem:[%s181 + $0x18] sm:$0xff]
        %v196 = vld [vmem:[%s181 + $0x20] sm:$0xff]
        %v197 = vld [vmem:[%s181 + $0x28] sm:$0xff]
        %v198 = vld [vmem:[%s181 + $0x30] sm:$0xff]
        %v199 = vld [vmem:[%s181 + $0x38] sm:$0xff]
        %v200 = vld [vmem:[%s181 + $0x40] sm:$0xff]
        %v201 = vld [vmem:[%s181 + $0x48] sm:$0xff]
        %v202 = vld [vmem:[%s181 + $0x50] sm:$0xff]
        %v203 = vld [vmem:[%s181 + $0x58] sm:$0xff]
        %v204 = vld [vmem:[%s181 + $0x60] sm:$0xff]
        %v205 = vld [vmem:[%s181 + $0x68] sm:$0xff]
        %v206 = vld [vmem:[%s181 + $0x70] sm:$0xff]
        %v207 = vld [vmem:[%s181 + $0x78] sm:$0xff]
        %v208 = vld [vmem:[%s1] sm:$0x1f]
        %v209 = vld [vmem:[%s2] sm:$0x1]
        %v211 = vperm.slane %v209, 0
        %vm213 = vcmask 39936
        %v215 = vsel %vm213, %v192, 0
        %v218 = vsel %vm213, %v193, 0
        %v221 = vsel %vm213, %v194, 0
        %v224 = vsel %vm213, %v195, 0
        %v227 = vsel %vm213, %v196, 0
        %v230 = vsel %vm213, %v197, 0
        %v233 = vsel %vm213, %v198, 0
        %v236 = vsel %vm213, %v199, 0
        %v239 = vsel %vm213, %v200, 0
        %v242 = vsel %vm213, %v201, 0
        %v245 = vsel %vm213, %v202, 0
        %v248 = vsel %vm213, %v203, 0
        %v251 = vsel %vm213, %v204, 0
        %v254 = vsel %vm213, %v205, 0
        %v257 = vsel %vm213, %v206, 0
        %v260 = vsel %vm213, %v207, 0
        %v263 = vsel %vm213, %v208, 0
        %265 = vmatpush.xpose.msra.mxu0 0.0
        %266 = vmatpush.xpose.msra.mxu0 0.0
        %267 = vmatpush.xpose.msra.mxu0 0.0
        %268 = vmatpush.xpose.msra.mxu0 0.0
        %269 = vmatpush.xpose.msra.mxu0 0.0
        %270 = vmatpush.xpose.msra.mxu0 0.0
        %271 = vmatpush.xpose.msra.mxu0 0.0
        %272 = vmatpush.xpose.msra.mxu0 0.0
        %273 = vmatpush.xpose.msra.mxu0 0.0
        %274 = vmatpush.xpose.msra.mxu0 0.0
        %275 = vmatpush.xpose.msra.mxu0 0.0
        %276 = vmatpush.xpose.msra.mxu0 0.0
        %277 = vmatpush.xpose.msra.mxu0 0.0
        %278 = vmatpush.xpose.msra.mxu0 0.0
        %279 = vmatpush.xpose.msra.mxu0 0.0
        %280 = vmatpush.xpose.msra.mxu0 %v263
        %281 = vmatmul.f32.gmra.mxu0 %v215
        %v282 = vpop.f32.mrf.mxu0
        %v283 = vadd.f32 %v211, %v282
        %284 = vmatmul.f32.gmra.mxu0 %v218
        %v285 = vpop.f32.mrf.mxu0
        %v286 = vadd.f32 %v211, %v285
        %287 = vmatmul.f32.gmra.mxu0 %v221
        %v288 = vpop.f32.mrf.mxu0
        %v289 = vadd.f32 %v211, %v288
        %290 = vmatmul.f32.gmra.mxu0 %v224
        %v291 = vpop.f32.mrf.mxu0
        %v292 = vadd.f32 %v211, %v291
        %293 = vmatmul.f32.gmra.mxu0 %v227
        %v294 = vpop.f32.mrf.mxu0
        %v295 = vadd.f32 %v211, %v294
        %296 = vmatmul.f32.gmra.mxu0 %v230
        %v297 = vpop.f32.mrf.mxu0
        %v298 = vadd.f32 %v211, %v297
        %299 = vmatmul.f32.gmra.mxu0 %v233
        %v300 = vpop.f32.mrf.mxu0
        %v301 = vadd.f32 %v211, %v300
        %302 = vmatmul.f32.gmra.mxu0 %v236
        %v303 = vpop.f32.mrf.mxu0
        %v304 = vadd.f32 %v211, %v303
        %305 = vmatmul.f32.gmra.mxu0 %v239
        %v306 = vpop.f32.mrf.mxu0
        %v307 = vadd.f32 %v211, %v306
        %308 = vmatmul.f32.gmra.mxu0 %v242
        %v309 = vpop.f32.mrf.mxu0
        %v310 = vadd.f32 %v211, %v309
        %311 = vmatmul.f32.gmra.mxu0 %v245
        %v312 = vpop.f32.mrf.mxu0
        %v313 = vadd.f32 %v211, %v312
        %314 = vmatmul.f32.gmra.mxu0 %v248
        %v315 = vpop.f32.mrf.mxu0
        %v316 = vadd.f32 %v211, %v315
        %317 = vmatmul.f32.gmra.mxu0 %v251
        %v318 = vpop.f32.mrf.mxu0
        %v319 = vadd.f32 %v211, %v318
        %320 = vmatmul.f32.gmra.mxu0 %v254
        %v321 = vpop.f32.mrf.mxu0
        %v322 = vadd.f32 %v211, %v321
        %323 = vmatmul.f32.gmra.mxu0 %v257
        %v324 = vpop.f32.mrf.mxu0
        %v325 = vadd.f32 %v211, %v324
        %326 = vmatmul.f32.gmra.mxu0 %v260
        %v327 = vpop.f32.mrf.mxu0
        %v328 = vadd.f32 %v211, %v327
        %329 = vdwg.mxu0
        %330 = vst.msk [vmem:[%s172] sm:$0xff] %vm213, %v283
        %331 = vst.msk [vmem:[%s172 + $0x8] sm:$0xff] %vm213, %v286
        %332 = vst.msk [vmem:[%s172 + $0x10] sm:$0xff] %vm213, %v289
        %333 = vst.msk [vmem:[%s172 + $0x18] sm:$0xff] %vm213, %v292
        %334 = vst.msk [vmem:[%s172 + $0x20] sm:$0xff] %vm213, %v295
        %335 = vst.msk [vmem:[%s172 + $0x28] sm:$0xff] %vm213, %v298
        %336 = vst.msk [vmem:[%s172 + $0x30] sm:$0xff] %vm213, %v301
        %337 = vst.msk [vmem:[%s172 + $0x38] sm:$0xff] %vm213, %v304
        %338 = vst.msk [vmem:[%s172 + $0x40] sm:$0xff] %vm213, %v307
        %339 = vst.msk [vmem:[%s172 + $0x48] sm:$0xff] %vm213, %v310
        %340 = vst.msk [vmem:[%s172 + $0x50] sm:$0xff] %vm213, %v313
        %341 = vst.msk [vmem:[%s172 + $0x58] sm:$0xff] %vm213, %v316
        %342 = vst.msk [vmem:[%s172 + $0x60] sm:$0xff] %vm213, %v319
        %343 = vst.msk [vmem:[%s172 + $0x68] sm:$0xff] %vm213, %v322
        %344 = vst.msk [vmem:[%s172 + $0x70] sm:$0xff] %vm213, %v325
        %345 = vst.msk [vmem:[%s172 + $0x78] sm:$0xff] %vm213, %v328
        %s346 = sand.u32 %s90, 1
        %s347 = sand.u32 %s90, 1
        %s348 = smul.addr %s347, 128
        %s349 = scalar_lea.vmem [#allocation2], %s348
        // Predicated region
        $region33: #{tpu_custom_call.1} parent=31 // pred_check
          %p350 = pneg %p100
        $region34: #{tpu_custom_call.1} parent=31 // pred_check_branch
          %352 = sbr.rel (%p350) target = $region36
        $region35: #{tpu_custom_call.1} parent=31 // pred_region
          %s353 = smul.u32 16, %s14
          %s354 = ssub.s32 33, %s353
          %p355 = scmp.lt.s32.totalorder %s354, 16
          %s356 = scalar_select %p355, %s354, 16
          %s357 = smul.u32 8, %s356
          %p358 = scmp.ne.s32.totalorder 0, %s357
          %s359 = smul.addr %s353, 8
          %s360 = scalar_lea.vmem %s3, %s359
          // Predicated region
          $region37: #{tpu_custom_call.1} parent=35 // pred_check
            %p361 = pneg %p358
          $region38: #{tpu_custom_call.1} parent=35 // pred_check_branch
            %363 = sbr.rel (%p361) target = $region40
          $region39: #{tpu_custom_call.1} parent=35 // pred_region
            // Predicated region
            $region41: #{tpu_custom_call.1} parent=39 // pred_check
              _
            $region42: #{tpu_custom_call.1} parent=39 // pred_check_branch
              %365 = sbr.rel (0) target = $region44
            $region43: #{tpu_custom_call.1} parent=39 // pred_region
              // Predicated region
              $region63: #{tpu_custom_call.1} parent=43 // pred_check
                _
              $region64: #{tpu_custom_call.1} parent=43 // pred_check_branch
                %445 = sbr.rel (0) target = $region66
              $region65: #{tpu_custom_call.1} parent=43 // pred_region
                %s446 = sshrl.u32 %s356, 4
                // While loop
                $region67: #{tpu_custom_call.1} parent=65 // loop_pre_header
                  _
                $region68: #{tpu_custom_call.1} parent=65 // loop_header
                  %s448 = sphi 0, %s450
                  %p449 = scmp.ge.s32.totalorder %s448, %s446
                  %s453 = sphi 0, %s490
                  %s454 = sphi %s349, %s493
                  %s455 = sphi %s360, %s494
                $region69: #{tpu_custom_call.1} parent=65 // loop_header_branch
                  %452 = sbr.rel (%p449) target = $region73
                $region70: #{tpu_custom_call.1} parent=65 // loop_body
                  %v456 = vld [vmem:[%s454] sm:$0xff]
                  %457 = vst [vmem:[%s455] sm:$0xff] %v456
                  %v458 = vld [vmem:[%s454 + $0x8] sm:$0xff]
                  %459 = vst [vmem:[%s455 + $0x8] sm:$0xff] %v458
                  %v460 = vld [vmem:[%s454 + $0x10] sm:$0xff]
                  %461 = vst [vmem:[%s455 + $0x10] sm:$0xff] %v460
                  %v462 = vld [vmem:[%s454 + $0x18] sm:$0xff]
                  %463 = vst [vmem:[%s455 + $0x18] sm:$0xff] %v462
                  %v464 = vld [vmem:[%s454 + $0x20] sm:$0xff]
                  %465 = vst [vmem:[%s455 + $0x20] sm:$0xff] %v464
                  %v466 = vld [vmem:[%s454 + $0x28] sm:$0xff]
                  %467 = vst [vmem:[%s455 + $0x28] sm:$0xff] %v466
                  %v468 = vld [vmem:[%s454 + $0x30] sm:$0xff]
                  %469 = vst [vmem:[%s455 + $0x30] sm:$0xff] %v468
                  %v470 = vld [vmem:[%s454 + $0x38] sm:$0xff]
                  %471 = vst [vmem:[%s455 + $0x38] sm:$0xff] %v470
                  %v472 = vld [vmem:[%s454 + $0x40] sm:$0xff]
                  %473 = vst [vmem:[%s455 + $0x40] sm:$0xff] %v472
                  %v474 = vld [vmem:[%s454 + $0x48] sm:$0xff]
                  %475 = vst [vmem:[%s455 + $0x48] sm:$0xff] %v474
                  %v476 = vld [vmem:[%s454 + $0x50] sm:$0xff]
                  %477 = vst [vmem:[%s455 + $0x50] sm:$0xff] %v476
                  %v478 = vld [vmem:[%s454 + $0x58] sm:$0xff]
                  %479 = vst [vmem:[%s455 + $0x58] sm:$0xff] %v478
                  %v480 = vld [vmem:[%s454 + $0x60] sm:$0xff]
                  %481 = vst [vmem:[%s455 + $0x60] sm:$0xff] %v480
                  %v482 = vld [vmem:[%s454 + $0x68] sm:$0xff]
                  %483 = vst [vmem:[%s455 + $0x68] sm:$0xff] %v482
                  %v484 = vld [vmem:[%s454 + $0x70] sm:$0xff]
                  %485 = vst [vmem:[%s455 + $0x70] sm:$0xff] %v484
                  %v486 = vld [vmem:[%s454 + $0x78] sm:$0xff]
                  %487 = vst [vmem:[%s455 + $0x78] sm:$0xff] %v486
                  %s488 = sadd.s32 1, %s453
                  %p489 = scmp.ge.s32.totalorder %s488, %s446
                  %s490 = scalar_select %p489, 0, %s488
                  %s491 = smul.u32 %s490, 128
                  %s492 = smul.u32 %s490, 128
                  %s493 = scalar_lea.vmem %s349, %s491 [#allocation2]
                  %s494 = scalar_lea.vmem %s360, %s492
                $region71: #{tpu_custom_call.1} parent=65 // loop_footer
                  %s450 = sadd.s32 %s448, 1
                $region72: #{tpu_custom_call.1} parent=65 // loop_footer_branch
                  %447 = sbr.rel target = $region68
                $region73: #{tpu_custom_call.1} parent=65 // loop_exit
                  _
                %s495 = sshrl.u32 %s356, 4
                %s496 = sand.u32 %s356, 15
                %s497 = smul.u32 %s495, 16
                %s498 = smul.u32 8, %s497
                %s499 = scalar_lea.vmem %s349, %s498 [#allocation2]
                %s500 = smul.u32 8, %s497
                %s501 = scalar_lea.vmem %s360, %s500
                // While loop
                $region74: #{tpu_custom_call.1} parent=65 // loop_pre_header
                  _
                $region75: #{tpu_custom_call.1} parent=65 // loop_header
                  %s503 = sphi 0, %s505
                  %p504 = scmp.ge.s32.totalorder %s503, %s496
                  %s508 = sphi 0, %s515
                  %s509 = sphi %s499, %s518
                  %s510 = sphi %s501, %s519
                $region76: #{tpu_custom_call.1} parent=65 // loop_header_branch
                  %507 = sbr.rel (%p504) target = $region80
                $region77: #{tpu_custom_call.1} parent=65 // loop_body
                  %v511 = vld [vmem:[%s509] sm:$0xff]
                  %512 = vst [vmem:[%s510] sm:$0xff] %v511
                  %s513 = sadd.s32 1, %s508
                  %p514 = scmp.ge.s32.totalorder %s513, %s496
                  %s515 = scalar_select %p514, 0, %s513
                  %s516 = smul.u32 %s515, 8
                  %s517 = smul.u32 %s515, 8
                  %s518 = scalar_lea.vmem %s499, %s516 [#allocation2]
                  %s519 = scalar_lea.vmem %s501, %s517
                $region78: #{tpu_custom_call.1} parent=65 // loop_footer
                  %s505 = sadd.s32 %s503, 1
                $region79: #{tpu_custom_call.1} parent=65 // loop_footer_branch
                  %502 = sbr.rel target = $region75
                $region80: #{tpu_custom_call.1} parent=65 // loop_exit
                  _
              $region66: #{tpu_custom_call.1} parent=43 // pred_fallthru
                _
              // Predicated region
              $region81: #{tpu_custom_call.1} parent=43 // pred_check
                _
              $region82: #{tpu_custom_call.1} parent=43 // pred_check_branch
                %521 = sbr.rel target = $region84
              $region83: #{tpu_custom_call.1} parent=43 // pred_region
                _
              $region84: #{tpu_custom_call.1} parent=43 // pred_fallthru
                _
            $region44: #{tpu_custom_call.1} parent=39 // pred_fallthru
              _
            // Predicated region
            $region45: #{tpu_custom_call.1} parent=39 // pred_check
              _
            $region46: #{tpu_custom_call.1} parent=39 // pred_check_branch
              %367 = sbr.rel target = $region48
            $region47: #{tpu_custom_call.1} parent=39 // pred_region
              %s369 = ssub.s32 256, 1
              %s370 = sshrl.u32 %s356, 4
              // While loop
              $region49: #{tpu_custom_call.1} parent=47 // loop_pre_header
                _
              $region50: #{tpu_custom_call.1} parent=47 // loop_header
                %s372 = sphi 0, %s374
                %p373 = scmp.ge.s32.totalorder %s372, %s370
                %s377 = sphi 0, %s414
                %s378 = sphi %s349, %s417
                %s379 = sphi %s360, %s418
              $region51: #{tpu_custom_call.1} parent=47 // loop_header_branch
                %376 = sbr.rel (%p373) target = $region55
              $region52: #{tpu_custom_call.1} parent=47 // loop_body
                %v380 = vld [vmem:[%s378] sm:%s369]
                %381 = vst [vmem:[%s379] sm:%s369] %v380
                %v382 = vld [vmem:[%s378 + $0x8] sm:%s369]
                %383 = vst [vmem:[%s379 + $0x8] sm:%s369] %v382
                %v384 = vld [vmem:[%s378 + $0x10] sm:%s369]
                %385 = vst [vmem:[%s379 + $0x10] sm:%s369] %v384
                %v386 = vld [vmem:[%s378 + $0x18] sm:%s369]
                %387 = vst [vmem:[%s379 + $0x18] sm:%s369] %v386
                %v388 = vld [vmem:[%s378 + $0x20] sm:%s369]
                %389 = vst [vmem:[%s379 + $0x20] sm:%s369] %v388
                %v390 = vld [vmem:[%s378 + $0x28] sm:%s369]
                %391 = vst [vmem:[%s379 + $0x28] sm:%s369] %v390
                %v392 = vld [vmem:[%s378 + $0x30] sm:%s369]
                %393 = vst [vmem:[%s379 + $0x30] sm:%s369] %v392
                %v394 = vld [vmem:[%s378 + $0x38] sm:%s369]
                %395 = vst [vmem:[%s379 + $0x38] sm:%s369] %v394
                %v396 = vld [vmem:[%s378 + $0x40] sm:%s369]
                %397 = vst [vmem:[%s379 + $0x40] sm:%s369] %v396
                %v398 = vld [vmem:[%s378 + $0x48] sm:%s369]
                %399 = vst [vmem:[%s379 + $0x48] sm:%s369] %v398
                %v400 = vld [vmem:[%s378 + $0x50] sm:%s369]
                %401 = vst [vmem:[%s379 + $0x50] sm:%s369] %v400
                %v402 = vld [vmem:[%s378 + $0x58] sm:%s369]
                %403 = vst [vmem:[%s379 + $0x58] sm:%s369] %v402
                %v404 = vld [vmem:[%s378 + $0x60] sm:%s369]
                %405 = vst [vmem:[%s379 + $0x60] sm:%s369] %v404
                %v406 = vld [vmem:[%s378 + $0x68] sm:%s369]
                %407 = vst [vmem:[%s379 + $0x68] sm:%s369] %v406
                %v408 = vld [vmem:[%s378 + $0x70] sm:%s369]
                %409 = vst [vmem:[%s379 + $0x70] sm:%s369] %v408
                %v410 = vld [vmem:[%s378 + $0x78] sm:%s369]
                %411 = vst [vmem:[%s379 + $0x78] sm:%s369] %v410
                %s412 = sadd.s32 1, %s377
                %p413 = scmp.ge.s32.totalorder %s412, %s370
                %s414 = scalar_select %p413, 0, %s412
                %s415 = smul.u32 %s414, 128
                %s416 = smul.u32 %s414, 128
                %s417 = scalar_lea.vmem %s349, %s415 [#allocation2]
                %s418 = scalar_lea.vmem %s360, %s416
              $region53: #{tpu_custom_call.1} parent=47 // loop_footer
                %s374 = sadd.s32 %s372, 1
              $region54: #{tpu_custom_call.1} parent=47 // loop_footer_branch
                %371 = sbr.rel target = $region50
              $region55: #{tpu_custom_call.1} parent=47 // loop_exit
                _
              %s419 = sshrl.u32 %s356, 4
              %s420 = sand.u32 %s356, 15
              %s421 = smul.u32 %s419, 16
              %s422 = smul.u32 8, %s421
              %s423 = scalar_lea.vmem %s349, %s422 [#allocation2]
              %s424 = smul.u32 8, %s421
              %s425 = scalar_lea.vmem %s360, %s424
              // While loop
              $region56: #{tpu_custom_call.1} parent=47 // loop_pre_header
                _
              $region57: #{tpu_custom_call.1} parent=47 // loop_header
                %s427 = sphi 0, %s429
                %p428 = scmp.ge.s32.totalorder %s427, %s420
                %s432 = sphi 0, %s439
                %s433 = sphi %s423, %s442
                %s434 = sphi %s425, %s443
              $region58: #{tpu_custom_call.1} parent=47 // loop_header_branch
                %431 = sbr.rel (%p428) target = $region62
              $region59: #{tpu_custom_call.1} parent=47 // loop_body
                %v435 = vld [vmem:[%s433] sm:%s369]
                %436 = vst [vmem:[%s434] sm:%s369] %v435
                %s437 = sadd.s32 1, %s432
                %p438 = scmp.ge.s32.totalorder %s437, %s420
                %s439 = scalar_select %p438, 0, %s437
                %s440 = smul.u32 %s439, 8
                %s441 = smul.u32 %s439, 8
                %s442 = scalar_lea.vmem %s423, %s440 [#allocation2]
                %s443 = scalar_lea.vmem %s425, %s441
              $region60: #{tpu_custom_call.1} parent=47 // loop_footer
                %s429 = sadd.s32 %s427, 1
              $region61: #{tpu_custom_call.1} parent=47 // loop_footer_branch
                %426 = sbr.rel target = $region57
              $region62: #{tpu_custom_call.1} parent=47 // loop_exit
                _
            $region48: #{tpu_custom_call.1} parent=39 // pred_fallthru
              _
          $region40: #{tpu_custom_call.1} parent=35 // pred_fallthru
            _
          %522 = vnop
        $region36: #{tpu_custom_call.1} parent=31 // pred_fallthru
          _
      $region32: #{tpu_custom_call.1} parent=5 // pred_fallthru
        _
      %p523 = scmp.le.s32.totalorder 2, %s9
      // Predicated region
      $region85: #{tpu_custom_call.1} parent=5 // pred_check
        %p524 = pneg %p523
      $region86: #{tpu_custom_call.1} parent=5 // pred_check_branch
        %526 = sbr.rel (%p524) target = $region88
      $region87: #{tpu_custom_call.1} parent=5 // pred_region
        %s527 = ssub.s32 %s9, 2
        // Predicated region
        $region89: #{tpu_custom_call.1} parent=87 // pred_check
          %p528 = pneg %p106
        $region90: #{tpu_custom_call.1} parent=87 // pred_check_branch
          %530 = sbr.rel (%p528) target = $region92
        $region91: #{tpu_custom_call.1} parent=87 // pred_region
          %s531 = sand.u32 %s91, 1
          %s532 = sand.u32 %s91, 1
          %s533 = smul.addr %s532, 128
          %s534 = scalar_lea.vmem [#allocation2], %s533
        $region92: #{tpu_custom_call.1} parent=87 // pred_fallthru
          _
      $region88: #{tpu_custom_call.1} parent=5 // pred_fallthru
        _
    $region6: #{tpu_custom_call.1} parent=1 // loop_footer
      %s13 = sadd.s32 1, %s9
    $region7: #{tpu_custom_call.1} parent=1 // loop_footer_branch
      %8 = sbr.rel target = $region3
    $region8: #{tpu_custom_call.1} parent=1 // loop_exit
      _

</llo_original>
